<compile_context>
chip_gen: v6e
topology: v6e:2x2x1
jax: 0.10.0
libtpu: 0.0.40
codegen_flags: <defaults>
</compile_context>

<pallas_src>
import functools
import math

import jax
import jax.numpy as jnp
import numpy as np
from jax.experimental import pallas as pl
from jax.experimental.pallas import tpu as pltpu

D_MODEL = 24
HEADS = 4
D_K = D_MODEL // HEADS
LN_EPS = 1e-5
SLAB_LANES = 128          # one lane tile; every packed constant starts at lane 0


def _round_up8(n):
    return ((n + 7) // 8) * 8


def _slab_layout(B, Sx, Sy):
    """Row offsets (multiples of 8) of each constant inside the packed slab."""
    nbd = B * HEADS * Sy                  # rows of the (batch, head) block-diagonal
    entries = [
        ("wq", D_MODEL), ("wk", D_MODEL), ("wv", D_MODEL), ("wo", D_MODEL),
        ("bq", 1), ("bk", 1), ("bv", 1), ("bo", 1),
        ("gamma", 1), ("beta", 1),
        ("mask", nbd),                    # (nbd, D)      head selector
        ("repl", nbd),                    # (nbd, B*Sy)   row replication selector
        ("bones", nbd),                   # (nbd, nbd)    same-(batch,head) segment
        ("bmask", B * Sx),                # (B*Sx, nbd)   additive -1e30 cross-batch mask
    ]
    off = {}
    r = 0
    for name, rows in entries:
        off[name] = r
        r += _round_up8(rows)
    return off, r


def cross_attention_kernel(x_ref, y_ref, c_ref, o_ref, *, B, Sx, Sy, off):
    D = D_MODEL
    nbd = B * HEADS * Sy
    nys = B * Sy

    x = x_ref[...]                        # (B*Sx, D)
    y = y_ref[...]                        # (B*Sy, D)

    def cblk(name, rows, cols):
        r = off[name]
        return c_ref[r:r + rows, :cols]   # static slice of the packed slab (free)

    wq = cblk("wq", D, D)
    wk = cblk("wk", D, D)
    wv = cblk("wv", D, D)
    wo = cblk("wo", D, D)
    bq = cblk("bq", 1, D)
    bk = cblk("bk", 1, D)
    bv = cblk("bv", 1, D)
    bo = cblk("bo", 1, D)
    gamma = cblk("gamma", 1, D)
    beta = cblk("beta", 1, D)
    mask = cblk("mask", nbd, D)
    repl = cblk("repl", nbd, nys)
    bones = cblk("bones", nbd, nbd)
    bmask = cblk("bmask", B * Sx, nbd)

    # Projections over all rows at once (tall LHS for the MXU).
    q = jnp.dot(x, wq, preferred_element_type=jnp.float32) + bq      # (B*Sx, D)
    k = jnp.dot(y, wk, preferred_element_type=jnp.float32) + bk      # (B*Sy, D)
    v = jnp.dot(y, wv, preferred_element_type=jnp.float32) + bv      # (B*Sy, D)

    # Block-diagonal (batch, head) expansion via a constant replication matmul
    # (MXU) + head mask (one VPU multiply) -- no sublane-misaligned concats.
    k_bd = jnp.dot(repl, k, preferred_element_type=jnp.float32) * mask   # (nbd, D)
    v_bd = jnp.dot(repl, v, preferred_element_type=jnp.float32) * mask   # (nbd, D)

    # scores[(b,i), (b',h,j)] = q_h(b,i) . k_h(b',j)  (1/sqrt(d_k) already in Wq)
    scores = jax.lax.dot_general(q, k_bd, (((1,), (1,)), ((), ())),
                                 preferred_element_type=jnp.float32)     # (B*Sx, nbd)
    scores = scores + bmask               # -1e30 on cross-batch columns

    # Per-(batch, head)-segment softmax: global row max is a valid stabilizer
    # (>= every segment max); segment sums come from one matmul with `bones`.
    m = jnp.max(scores, axis=-1, keepdims=True)
    p = jnp.exp(scores - m)                # cross-batch entries underflow to 0
    denom = jnp.dot(p, bones, preferred_element_type=jnp.float32)
    denom = jnp.maximum(denom, 1e-30)      # guard empty/underflowed segments
    p = p * pl.reciprocal(denom)

    # Single P@V matmul directly yields the head-concatenated output.
    attn = jnp.dot(p, v_bd, preferred_element_type=jnp.float32)          # (B*Sx, D)

    out = jnp.dot(attn, wo, preferred_element_type=jnp.float32) + bo
    # TODO(synk): dropout is identity (eval mode); training-mode dropout not implemented.
    res = out + x

    # LayerNorm over the feature dim.
    mean = jnp.mean(res, axis=-1, keepdims=True)
    var = jnp.mean((res - mean) ** 2, axis=-1, keepdims=True)
    normed = (res - mean) * jax.lax.rsqrt(var + LN_EPS)
    o_ref[...] = (normed * gamma + beta).astype(o_ref.dtype)


def pack_constants(params, B, Sx, Sy):
    """One-time packing of all weights/biases/selectors into a (rows, 128) slab."""
    wq, bq, wk, bk, wv, bv, wo, bo, gamma, beta = params
    D = D_MODEL
    scale = math.sqrt(float(D_K))
    off, total_rows = _slab_layout(B, Sx, Sy)
    nbd = B * HEADS * Sy

    # Constant selector matrices (numpy, computed once).
    rid = np.arange(nbd)
    b_r = rid // (HEADS * Sy)
    h_r = (rid // Sy) % HEADS
    s_r = rid % Sy
    d = np.arange(D)
    mask = (d[None, :] // D_K == h_r[:, None]).astype(np.float32)            # (nbd, D)
    cid = np.arange(B * Sy)
    b_c = cid // Sy
    s_c = cid % Sy
    repl = ((b_r[:, None] == b_c[None, :]) &
            (s_r[:, None] == s_c[None, :])).astype(np.float32)               # (nbd, B*Sy)
    bones = ((b_r[:, None] == b_r[None, :]) &
             (h_r[:, None] == h_r[None, :])).astype(np.float32)              # (nbd, nbd)
    qrow = np.arange(B * Sx)
    b_q = qrow // Sx
    bmask = np.where(b_q[:, None] == b_r[None, :], 0.0, -1e30).astype(np.float32)

    slab = jnp.zeros((total_rows, SLAB_LANES), jnp.float32)

    def put(s, name, val):
        val = jnp.asarray(val, jnp.float32)
        if val.ndim == 1:
            val = val.reshape(1, -1)
        r = off[name]
        rows, cols = val.shape
        return s.at[r:r + rows, :cols].set(val)

    slab = put(slab, "wq", wq.T / scale)          # fold 1/sqrt(d_k) into Q projection
    slab = put(slab, "bq", bq / scale)
    slab = put(slab, "wk", wk.T)
    slab = put(slab, "bk", bk)
    slab = put(slab, "wv", wv.T)
    slab = put(slab, "bv", bv)
    slab = put(slab, "wo", wo.T)
    slab = put(slab, "bo", bo)
    slab = put(slab, "gamma", gamma)
    slab = put(slab, "beta", beta)
    slab = put(slab, "mask", mask)
    slab = put(slab, "repl", repl)
    slab = put(slab, "bones", bones)
    slab = put(slab, "bmask", bmask)
    return slab


def make_cross_attention(B, Sx, Sy, dtype=jnp.float32):
    off, total_rows = _slab_layout(B, Sx, Sy)
    kern = functools.partial(cross_attention_kernel, B=B, Sx=Sx, Sy=Sy, off=off)

    def full(shape):
        return pl.BlockSpec(shape, lambda i: (0,) * len(shape))

    call = pl.pallas_call(
        kern,
        out_shape=jax.ShapeDtypeStruct((B * Sx, D_MODEL), dtype),
        grid_spec=pltpu.PrefetchScalarGridSpec(
            num_scalar_prefetch=0,
            grid=(1,),                                    # whole problem, one step
            in_specs=[
                full((B * Sx, D_MODEL)),                  # x (flattened)
                full((B * Sy, D_MODEL)),                  # y (flattened)
                full((total_rows, SLAB_LANES)),           # packed constant slab
            ],
            out_specs=full((B * Sx, D_MODEL)),
        ),
        compiler_params=pltpu.CompilerParams(
            dimension_semantics=("arbitrary",)),
    )

    @jax.jit
    def run(x, y, slab):
        x2 = x.reshape(B * Sx, D_MODEL)
        y2 = y.reshape(B * Sy, D_MODEL)
        return call(x2, y2, slab).reshape(B, Sx, D_MODEL)

    return run


def reference(x, y, params):
    """Pure-JAX reference matching the PyTorch forward (eval mode)."""
    wq, bq, wk, bk, wv, bv, wo, bo, gamma, beta = params
    B, Sx, D = x.shape
    _, Sy, _ = y.shape
    scale = math.sqrt(float(D_K))

    q = x @ wq.T + bq
    k = y @ wk.T + bk
    v = y @ wv.T + bv
    q = q.reshape(B, Sx, HEADS, D_K).transpose(0, 2, 1, 3)
    k = k.reshape(B, Sy, HEADS, D_K).transpose(0, 2, 1, 3)
    v = v.reshape(B, Sy, HEADS, D_K).transpose(0, 2, 1, 3)
    A = (q @ k.transpose(0, 1, 3, 2)) / scale
    A = jax.nn.softmax(A, axis=-1)
    A = (A @ v).transpose(0, 2, 1, 3).reshape(B, Sx, D)
    A = A @ wo.T + bo
    A = A + x
    mean = jnp.mean(A, axis=-1, keepdims=True)
    var = jnp.mean((A - mean) ** 2, axis=-1, keepdims=True)
    return (A - mean) * jax.lax.rsqrt(var + LN_EPS) * gamma + beta


def init_params(key):
    ks = jax.random.split(key, 8)
    bound = 1.0 / math.sqrt(D_MODEL)

    def lin(kw, kb):
        w = jax.random.uniform(kw, (D_MODEL, D_MODEL), jnp.float32, -bound, bound)
        b = jax.random.uniform(kb, (D_MODEL,), jnp.float32, -bound, bound)
        return w, b

    wq, bq = lin(ks[0], ks[1])
    wk, bk = lin(ks[2], ks[3])
    wv, bv = lin(ks[4], ks[5])
    wo, bo = lin(ks[6], ks[7])
    gamma = jnp.ones((D_MODEL,), jnp.float32)
    beta = jnp.zeros((D_MODEL,), jnp.float32)
    return (wq, bq, wk, bk, wv, bv, wo, bo, gamma, beta)


if __name__ == "__main__":
    key = jax.random.PRNGKey(0)
    k_p, k_x, k_y = jax.random.split(key, 3)

    B, Sx, Sy = 2, 8, 10
    params = init_params(k_p)
    x = jax.random.normal(k_x, (B, Sx, D_MODEL), jnp.float32)
    y = jax.random.normal(k_y, (B, Sy, D_MODEL), jnp.float32)

    # One-time prep (outside the per-call path).
    slab = jax.block_until_ready(pack_constants(params, B, Sx, Sy))
    cross_attention = make_cross_attention(B, Sx, Sy)

    out = cross_attention(x, y, slab)
    out = jax.block_until_ready(out)

    ref = jax.block_until_ready(reference(x, y, params))
    assert out.shape == (B, Sx, D_MODEL)
    assert jnp.allclose(out, ref, atol=1e-4, rtol=1e-4), (
        f"max err {jnp.max(jnp.abs(out - ref))}")

    print("KERNEL_OK")
</pallas_src>

<mosaic_0001>
module attributes {stable_mosaic.version = 11 : i64} {
  func.func @cross_attention_kernel(%arg0: i32, %arg1: memref<16x24xf32, #tpu.memory_space<vmem>>, %arg2: memref<20x24xf32, #tpu.memory_space<vmem>>, %arg3: memref<400x128xf32, #tpu.memory_space<vmem>>, %arg4: memref<16x24xf32, #tpu.memory_space<vmem>>) attributes {dimension_semantics = [#tpu.dimension_semantics<arbitrary>], iteration_bounds = array<i64: 1>, scalar_prefetch = 0 : i64, scratch_operands = 0 : i64, tpu.core_type = #tpu.core_type<tc>, window_params = [{pipeline_mode = #tpu.pipeline_mode<synchronous>, transform_indices = @transform_0, window_bounds = array<i64: 16, 24>}, {pipeline_mode = #tpu.pipeline_mode<synchronous>, transform_indices = @transform_1, window_bounds = array<i64: 20, 24>}, {pipeline_mode = #tpu.pipeline_mode<synchronous>, transform_indices = @transform_2, window_bounds = array<i64: 400, 128>}, {pipeline_mode = #tpu.pipeline_mode<synchronous>, transform_indices = @transform_3, window_bounds = array<i64: 16, 24>}]} {
    %c0 = arith.constant 0 : index
    %c0_0 = arith.constant 0 : index
    %0 = vector.load %arg1[%c0, %c0_0] : memref<16x24xf32, #tpu.memory_space<vmem>>, vector<16x24xf32>
    %c0_1 = arith.constant 0 : index
    %c0_2 = arith.constant 0 : index
    %1 = vector.load %arg2[%c0_1, %c0_2] : memref<20x24xf32, #tpu.memory_space<vmem>>, vector<20x24xf32>
    %c0_3 = arith.constant 0 : index
    %c0_4 = arith.constant 0 : index
    %2 = vector.load %arg3[%c0_3, %c0_4] : memref<400x128xf32, #tpu.memory_space<vmem>>, vector<24x24xf32>
    %c24 = arith.constant 24 : index
    %c0_5 = arith.constant 0 : index
    %3 = vector.load %arg3[%c24, %c0_5] : memref<400x128xf32, #tpu.memory_space<vmem>>, vector<24x24xf32>
    %c48 = arith.constant 48 : index
    %c0_6 = arith.constant 0 : index
    %4 = vector.load %arg3[%c48, %c0_6] : memref<400x128xf32, #tpu.memory_space<vmem>>, vector<24x24xf32>
    %c72 = arith.constant 72 : index
    %c0_7 = arith.constant 0 : index
    %5 = vector.load %arg3[%c72, %c0_7] : memref<400x128xf32, #tpu.memory_space<vmem>>, vector<24x24xf32>
    %c96 = arith.constant 96 : index
    %c0_8 = arith.constant 0 : index
    %6 = vector.load %arg3[%c96, %c0_8] : memref<400x128xf32, #tpu.memory_space<vmem>>, vector<1x24xf32>
    %c104 = arith.constant 104 : index
    %c0_9 = arith.constant 0 : index
    %7 = vector.load %arg3[%c104, %c0_9] : memref<400x128xf32, #tpu.memory_space<vmem>>, vector<1x24xf32>
    %c112 = arith.constant 112 : index
    %c0_10 = arith.constant 0 : index
    %8 = vector.load %arg3[%c112, %c0_10] : memref<400x128xf32, #tpu.memory_space<vmem>>, vector<1x24xf32>
    %c120 = arith.constant 120 : index
    %c0_11 = arith.constant 0 : index
    %9 = vector.load %arg3[%c120, %c0_11] : memref<400x128xf32, #tpu.memory_space<vmem>>, vector<1x24xf32>
    %c128 = arith.constant 128 : index
    %c0_12 = arith.constant 0 : index
    %10 = vector.load %arg3[%c128, %c0_12] : memref<400x128xf32, #tpu.memory_space<vmem>>, vector<1x24xf32>
    %c136 = arith.constant 136 : index
    %c0_13 = arith.constant 0 : index
    %11 = vector.load %arg3[%c136, %c0_13] : memref<400x128xf32, #tpu.memory_space<vmem>>, vector<1x24xf32>
    %c144 = arith.constant 144 : index
    %c0_14 = arith.constant 0 : index
    %12 = vector.load %arg3[%c144, %c0_14] : memref<400x128xf32, #tpu.memory_space<vmem>>, vector<80x24xf32>
    %c224 = arith.constant 224 : index
    %c0_15 = arith.constant 0 : index
    %13 = vector.load %arg3[%c224, %c0_15] : memref<400x128xf32, #tpu.memory_space<vmem>>, vector<80x20xf32>
    %c304 = arith.constant 304 : index
    %c0_16 = arith.constant 0 : index
    %14 = vector.load %arg3[%c304, %c0_16] : memref<400x128xf32, #tpu.memory_space<vmem>>, vector<80x80xf32>
    %c384 = arith.constant 384 : index
    %c0_17 = arith.constant 0 : index
    %15 = vector.load %arg3[%c384, %c0_17] : memref<400x128xf32, #tpu.memory_space<vmem>>, vector<16x80xf32>
    %cst = arith.constant dense<0.000000e+00> : vector<16x24xf32>
    %16 = tpu.matmul %0, %2, %cst {dimension_numbers = #tpu.dot_dimension_numbers<[1], [0], [0], [1], [0, 0, 1, 1], [], []>} : vector<16x24xf32>, vector<24x24xf32>, vector<16x24xf32> -> vector<16x24xf32>
    %17 = vector.broadcast %6 : vector<1x24xf32> to vector<16x24xf32>
    %18 = arith.addf %16, %17 : vector<16x24xf32>
    %cst_18 = arith.constant dense<0.000000e+00> : vector<20x24xf32>
    %19 = tpu.matmul %1, %3, %cst_18 {dimension_numbers = #tpu.dot_dimension_numbers<[1], [0], [0], [1], [0, 0, 1, 1], [], []>} : vector<20x24xf32>, vector<24x24xf32>, vector<20x24xf32> -> vector<20x24xf32>
    %20 = vector.broadcast %7 : vector<1x24xf32> to vector<20x24xf32>
    %21 = arith.addf %19, %20 : vector<20x24xf32>
    %cst_19 = arith.constant dense<0.000000e+00> : vector<20x24xf32>
    %22 = tpu.matmul %1, %4, %cst_19 {dimension_numbers = #tpu.dot_dimension_numbers<[1], [0], [0], [1], [0, 0, 1, 1], [], []>} : vector<20x24xf32>, vector<24x24xf32>, vector<20x24xf32> -> vector<20x24xf32>
    %23 = vector.broadcast %8 : vector<1x24xf32> to vector<20x24xf32>
    %24 = arith.addf %22, %23 : vector<20x24xf32>
    %cst_20 = arith.constant dense<0.000000e+00> : vector<80x24xf32>
    %25 = tpu.matmul %13, %21, %cst_20 {dimension_numbers = #tpu.dot_dimension_numbers<[1], [0], [0], [1], [0, 0, 1, 1], [], []>} : vector<80x20xf32>, vector<20x24xf32>, vector<80x24xf32> -> vector<80x24xf32>
    %26 = arith.mulf %25, %12 : vector<80x24xf32>
    %cst_21 = arith.constant dense<0.000000e+00> : vector<80x24xf32>
    %27 = tpu.matmul %13, %24, %cst_21 {dimension_numbers = #tpu.dot_dimension_numbers<[1], [0], [0], [1], [0, 0, 1, 1], [], []>} : vector<80x20xf32>, vector<20x24xf32>, vector<80x24xf32> -> vector<80x24xf32>
    %28 = arith.mulf %27, %12 : vector<80x24xf32>
    %cst_22 = arith.constant dense<0.000000e+00> : vector<16x80xf32>
    %29 = tpu.matmul %18, %26, %cst_22 {dimension_numbers = #tpu.dot_dimension_numbers<[1], [1], [0], [0], [0, 0, 1, 0], [], []>} : vector<16x24xf32>, vector<80x24xf32>, vector<16x80xf32> -> vector<16x80xf32>
    %30 = arith.addf %29, %15 : vector<16x80xf32>
    %cst_23 = arith.constant dense<0xFF800000> : vector<16xf32>
    %31 = vector.multi_reduction <maximumf>, %30, %cst_23 [1] : vector<16x80xf32> to vector<16xf32>
    %32 = vector.shape_cast %31 : vector<16xf32> to vector<16x1xf32>
    %33 = vector.broadcast %32 : vector<16x1xf32> to vector<16x80xf32>
    %34 = arith.subf %30, %33 : vector<16x80xf32>
    %35 = math.exp %34 : vector<16x80xf32>
    %cst_24 = arith.constant dense<0.000000e+00> : vector<16x80xf32>
    %36 = tpu.matmul %35, %14, %cst_24 {dimension_numbers = #tpu.dot_dimension_numbers<[1], [0], [0], [1], [0, 0, 1, 1], [], []>} : vector<16x80xf32>, vector<80x80xf32>, vector<16x80xf32> -> vector<16x80xf32>
    %cst_25 = arith.constant 1.000000e-30 : f32
    %37 = vector.broadcast %cst_25 : f32 to vector<16x80xf32>
    %38 = arith.maximumf %36, %37 : vector<16x80xf32>
    %39 = tpu.reciprocal %38 : vector<16x80xf32> -> vector<16x80xf32>
    %40 = arith.mulf %35, %39 : vector<16x80xf32>
    %cst_26 = arith.constant dense<0.000000e+00> : vector<16x24xf32>
    %41 = tpu.matmul %40, %28, %cst_26 {dimension_numbers = #tpu.dot_dimension_numbers<[1], [0], [0], [1], [0, 0, 1, 1], [], []>} : vector<16x80xf32>, vector<80x24xf32>, vector<16x24xf32> -> vector<16x24xf32>
    %cst_27 = arith.constant dense<0.000000e+00> : vector<16x24xf32>
    %42 = tpu.matmul %41, %5, %cst_27 {dimension_numbers = #tpu.dot_dimension_numbers<[1], [0], [0], [1], [0, 0, 1, 1], [], []>} : vector<16x24xf32>, vector<24x24xf32>, vector<16x24xf32> -> vector<16x24xf32>
    %43 = vector.broadcast %9 : vector<1x24xf32> to vector<16x24xf32>
    %44 = arith.addf %42, %43 : vector<16x24xf32>
    %45 = arith.addf %44, %0 : vector<16x24xf32>
    %cst_28 = arith.constant dense<0.000000e+00> : vector<16xf32>
    %46 = vector.multi_reduction <add>, %45, %cst_28 [1] : vector<16x24xf32> to vector<16xf32>
    %47 = vector.shape_cast %46 : vector<16xf32> to vector<16x1xf32>
    %cst_29 = arith.constant 2.400000e+01 : f32
    %48 = vector.broadcast %cst_29 : f32 to vector<16x1xf32>
    %49 = arith.divf %47, %48 : vector<16x1xf32>
    %50 = vector.broadcast %49 : vector<16x1xf32> to vector<16x24xf32>
    %51 = arith.subf %45, %50 : vector<16x24xf32>
    %52 = arith.mulf %51, %51 : vector<16x24xf32>
    %cst_30 = arith.constant dense<0.000000e+00> : vector<16xf32>
    %53 = vector.multi_reduction <add>, %52, %cst_30 [1] : vector<16x24xf32> to vector<16xf32>
    %54 = vector.shape_cast %53 : vector<16xf32> to vector<16x1xf32>
    %cst_31 = arith.constant 2.400000e+01 : f32
    %55 = vector.broadcast %cst_31 : f32 to vector<16x1xf32>
    %56 = arith.divf %54, %55 : vector<16x1xf32>
    %57 = vector.broadcast %49 : vector<16x1xf32> to vector<16x24xf32>
    %58 = arith.subf %45, %57 : vector<16x24xf32>
    %cst_32 = arith.constant 9.99999974E-6 : f32
    %59 = vector.broadcast %cst_32 : f32 to vector<16x1xf32>
    %60 = arith.addf %56, %59 : vector<16x1xf32>
    %61 = math.rsqrt %60 : vector<16x1xf32>
    %62 = vector.broadcast %61 : vector<16x1xf32> to vector<16x24xf32>
    %63 = arith.mulf %58, %62 : vector<16x24xf32>
    %64 = vector.broadcast %10 : vector<1x24xf32> to vector<16x24xf32>
    %65 = arith.mulf %63, %64 : vector<16x24xf32>
    %66 = vector.broadcast %11 : vector<1x24xf32> to vector<16x24xf32>
    %67 = arith.addf %65, %66 : vector<16x24xf32>
    %c0_33 = arith.constant 0 : index
    %c0_34 = arith.constant 0 : index
    %68 = vector.load %arg4[%c0_33, %c0_34] : memref<16x24xf32, #tpu.memory_space<vmem>>, vector<16x24xf32>
    tpu.vector_store %arg4[%c0_33, %c0_34], %67 {strides = array<i32>} : memref<16x24xf32, #tpu.memory_space<vmem>>, vector<16x24xf32>,
    return
  }
  func.func @transform_0(%arg0: i32) -> (i32, i32) {
    %c0_i32 = arith.constant 0 : i32
    %c0_i32_0 = arith.constant 0 : i32
    %c0_i32_1 = arith.constant 0 : i32
    return %c0_i32, %c0_i32_0 : i32, i32
  }
  func.func @transform_1(%arg0: i32) -> (i32, i32) {
    %c0_i32 = arith.constant 0 : i32
    %c0_i32_0 = arith.constant 0 : i32
    %c0_i32_1 = arith.constant 0 : i32
    return %c0_i32, %c0_i32_0 : i32, i32
  }
  func.func @transform_2(%arg0: i32) -> (i32, i32) {
    %c0_i32 = arith.constant 0 : i32
    %c0_i32_0 = arith.constant 0 : i32
    %c0_i32_1 = arith.constant 0 : i32
    return %c0_i32, %c0_i32_0 : i32, i32
  }
  func.func @transform_3(%arg0: i32) -> (i32, i32) {
    %c0_i32 = arith.constant 0 : i32
    %c0_i32_0 = arith.constant 0 : i32
    %c0_i32_1 = arith.constant 0 : i32
    return %c0_i32, %c0_i32_0 : i32, i32
  }
}

</mosaic_0001>

<llo_original>
// kernel: run.1
$region0: #{run.1}
  #allocation0 [shape = 'u32[]', space=smem, size = 0x4, offset = 0x4, fixed_abs, tag = 'smem constant byte address 0x4 - core index']
  #allocation1 [shape = 'u32[144,128]{1,0:T(1,128)}', space=vmem, size = 0x12000, scoped, tag = 'internal scratch']
  %s0 = inlined_call_operand.vmem [shape: f32[16,24], index: 0, kind: input, shape index: {}]
  %s1 = inlined_call_operand.vmem [shape: f32[20,24], index: 1, kind: input, shape index: {}]
  %s2 = inlined_call_operand.hbm [shape: f32[400,128], index: 2, kind: input, shape index: {}]
  %s3 = inlined_call_operand.hbm [shape: f32[16,24], index: 3, kind: output, shape index: {}]
  %s4 = sld [smem:[#allocation0]]
  $region26: #{run.1} parent=0
    _
  %s6 = ssub.s32 1, %s4
  %s7 = scalar_select 0, %s6, %s4
  $region1: #{run.1} parent=0
    #allocation2 [shape = 'u8[204800]{0}', space=vmem, size = 0x32000, scoped, tag = 'input window, operand 2, single buffered']
    #allocation3 [shape = 's32[1]{0}', space=sflag, size = 0x4, scoped, tag = 'scoped memory for run.1']
    #allocation4 [shape = 's32[1]{0}', space=sflag, size = 0x4, scoped, tag = 'scoped memory for run.1']
    #allocation5 [shape = 'u8[8192]{0}', space=vmem, size = 0x2000, scoped, tag = 'output window, operand 0, single buffered']
    %8 = vsyncpa [#allocation3], 0
    %9 = vsyncpa [#allocation4], 0
    // Predicated region
    $region2: #{run.1} parent=1 // pred_check
      _
    $region3: #{run.1} parent=1 // pred_check_branch
      %11 = sbr.rel (0) target = $region5
    $region4: #{run.1} parent=1 // pred_region
      _
    $region5: #{run.1} parent=1 // pred_fallthru
      _
    // Predicated region
    $region6: #{run.1} parent=1 // pred_check
      _
    $region7: #{run.1} parent=1 // pred_check_branch
      %13 = sbr.rel (0) target = $region9
    $region8: #{run.1} parent=1 // pred_region
      _
    $region9: #{run.1} parent=1 // pred_fallthru
      _
    // Predicated region
    $region10: #{run.1} parent=1 // pred_check
      _
    $region11: #{run.1} parent=1 // pred_check_branch
      %15 = sbr.rel (0) target = $region13
    $region12: #{run.1} parent=1 // pred_region
      %s17 = ssub.s32 6400, 6400
      %18 = vsyncadd [#allocation3], %s17
      %s19 = sshll.u32 [#allocation2], 4
      %s20 = int_to_ptr.vmem [resolvable:$true] %s19
      %25 = dma.hbm_to_vmem [thread:$0]  %s2, 6400, %s20, [#allocation3], 128, 128, 8
    $region13: #{run.1} parent=1 // pred_fallthru
      _
    // Predicated region
    $region14: #{run.1} parent=1 // pred_check
      _
    $region15: #{run.1} parent=1 // pred_check_branch
      %27 = sbr.rel (0) target = $region17
    $region16: #{run.1} parent=1 // pred_region
      %28 = dma.done [#allocation3], 6400
    $region17: #{run.1} parent=1 // pred_fallthru
      _
    %v29 = vld [vmem:[%s0] sm:$0xff]
    %v30 = vld [vmem:[%s0 + $0x8] sm:$0xff]
    %v31 = vld [vmem:[%s1] sm:$0xff]
    %v32 = vld [vmem:[%s1 + $0x8] sm:$0xff]
    %v33 = vld [vmem:[%s1 + $0x10] sm:$0xf]
    %v34 = vld [vmem:[#allocation2] sm:$0xff]
    %v35 = vld [vmem:[#allocation2 + $0x8] sm:$0xff]
    %v36 = vld [vmem:[#allocation2 + $0x10] sm:$0xff]
    %v37 = vld [vmem:[#allocation2 + $0x18] sm:$0xff]
    %v38 = vld [vmem:[#allocation2 + $0x20] sm:$0xff]
    %v39 = vld [vmem:[#allocation2 + $0x28] sm:$0xff]
    %v40 = vld [vmem:[#allocation2 + $0x30] sm:$0xff]
    %v41 = vld [vmem:[#allocation2 + $0x38] sm:$0xff]
    %v42 = vld [vmem:[#allocation2 + $0x40] sm:$0xff]
    %v43 = vld [vmem:[#allocation2 + $0x48] sm:$0xff]
    %v44 = vld [vmem:[#allocation2 + $0x50] sm:$0xff]
    %v45 = vld [vmem:[#allocation2 + $0x58] sm:$0xff]
    %v46 = vld [vmem:[#allocation2 + $0x60] sm:$0x1]
    %v47 = vld [vmem:[#allocation2 + $0x68] sm:$0x1]
    %v48 = vld [vmem:[#allocation2 + $0x70] sm:$0x1]
    %v49 = vld [vmem:[#allocation2 + $0x78] sm:$0x1]
    %v50 = vld [vmem:[#allocation2 + $0x80] sm:$0x1]
    %v51 = vld [vmem:[#allocation2 + $0x88] sm:$0x1]
    %v52 = vld [vmem:[#allocation2 + $0x90] sm:$0xff]
    %v53 = vld [vmem:[#allocation2 + $0x98] sm:$0xff]
    %v54 = vld [vmem:[#allocation2 + $0xa0] sm:$0xff]
    %v55 = vld [vmem:[#allocation2 + $0xa8] sm:$0xff]
    %v56 = vld [vmem:[#allocation2 + $0xb0] sm:$0xff]
    %v57 = vld [vmem:[#allocation2 + $0xb8] sm:$0xff]
    %v58 = vld [vmem:[#allocation2 + $0xc0] sm:$0xff]
    %v59 = vld [vmem:[#allocation2 + $0xc8] sm:$0xff]
    %v60 = vld [vmem:[#allocation2 + $0xd0] sm:$0xff]
    %v61 = vld [vmem:[#allocation2 + $0xd8] sm:$0xff]
    %v62 = vld [vmem:[#allocation2 + $0xe0] sm:$0xff]
    %v63 = vld [vmem:[#allocation2 + $0xe8] sm:$0xff]
    %v64 = vld [vmem:[#allocation2 + $0xf0] sm:$0xff]
    %v65 = vld [vmem:[#allocation2 + $0xf8] sm:$0xff]
    %v66 = vld [vmem:[#allocation2 + $0x100] sm:$0xff]
    %v67 = vld [vmem:[#allocation2 + $0x108] sm:$0xff]
    %v68 = vld [vmem:[#allocation2 + $0x110] sm:$0xff]
    %v69 = vld [vmem:[#allocation2 + $0x118] sm:$0xff]
    %v70 = vld [vmem:[#allocation2 + $0x120] sm:$0xff]
    %v71 = vld [vmem:[#allocation2 + $0x128] sm:$0xff]
    %v72 = vld [vmem:[#allocation2 + $0x130] sm:$0xff]
    %v73 = vld [vmem:[#allocation2 + $0x138] sm:$0xff]
    %v74 = vld [vmem:[#allocation2 + $0x140] sm:$0xff]
    %v75 = vld [vmem:[#allocation2 + $0x148] sm:$0xff]
    %v76 = vld [vmem:[#allocation2 + $0x150] sm:$0xff]
    %v77 = vld [vmem:[#allocation2 + $0x158] sm:$0xff]
    %v78 = vld [vmem:[#allocation2 + $0x160] sm:$0xff]
    %v79 = vld [vmem:[#allocation2 + $0x168] sm:$0xff]
    %v80 = vld [vmem:[#allocation2 + $0x170] sm:$0xff]
    %v81 = vld [vmem:[#allocation2 + $0x178] sm:$0xff]
    %v82 = vld [vmem:[#allocation2 + $0x180] sm:$0xff]
    %v83 = vld [vmem:[#allocation2 + $0x188] sm:$0xff]
    %v84 = vlaneseq
    %v85 = vshrl.u32 %v84, 7
    %v86 = vsub.s32 0, %v85
    %v87 = vrot.slane %v46, %v86
    %vm88 = vcmask 195584
    %v90 = vsel %vm88, %v29, 0
    %v93 = vsel %vm88, %v30, 0
    %95 = vmatprep.subr.mxu0 0.0
    %96 = vmatpush1.msra.mxu0 0.0
    %97 = vmatprep.subr.mxu0 0.0
    %98 = vmatpush1.msra.mxu0 0.0
    %99 = vmatprep.subr.mxu0 0.0
    %100 = vmatpush1.msra.mxu0 0.0
    %101 = vmatprep.subr.mxu0 0.0
    %102 = vmatpush1.msra.mxu0 0.0
    %103 = vmatprep.subr.mxu0 0.0
    %104 = vmatpush1.msra.mxu0 0.0
    %105 = vmatprep.subr.mxu0 0.0
    %106 = vmatpush1.msra.mxu0 0.0
    %107 = vmatprep.subr.mxu0 0.0
    %108 = vmatpush1.msra.mxu0 0.0
    %109 = vmatprep.subr.mxu0 0.0
    %110 = vmatpush1.msra.mxu0 0.0
    %111 = vmatprep.subr.mxu0 0.0
    %112 = vmatpush1.msra.mxu0 0.0
    %113 = vmatprep.subr.mxu0 0.0
    %114 = vmatpush1.msra.mxu0 0.0
    %115 = vmatprep.subr.mxu0 0.0
    %116 = vmatpush1.msra.mxu0 0.0
    %117 = vmatprep.subr.mxu0 0.0
    %118 = vmatpush1.msra.mxu0 0.0
    %119 = vmatprep.subr.mxu0 0.0
    %120 = vmatpush1.msra.mxu0 0.0
    %121 = vmatprep.subr.mxu0 0.0
    %122 = vmatpush1.msra.mxu0 %v36
    %123 = vmatprep.subr.mxu0 0.0
    %124 = vmatpush1.msra.mxu0 %v35
    %125 = vmatprep.subr.mxu0 0.0
    %126 = vmatpush1.msra.mxu0 %v34
    %127 = vmatprep.subr.mxu0 0.0
    %128 = vmatpush2.msra.mxu0 0.0
    %129 = vmatprep.subr.mxu0 0.0
    %130 = vmatpush2.msra.mxu0 0.0
    %131 = vmatprep.subr.mxu0 0.0
    %132 = vmatpush2.msra.mxu0 0.0
    %133 = vmatprep.subr.mxu0 0.0
    %134 = vmatpush2.msra.mxu0 0.0
    %135 = vmatprep.subr.mxu0 0.0
    %136 = vmatpush2.msra.mxu0 0.0
    %137 = vmatprep.subr.mxu0 0.0
    %138 = vmatpush2.msra.mxu0 0.0
    %139 = vmatprep.subr.mxu0 0.0
    %140 = vmatpush2.msra.mxu0 0.0
    %141 = vmatprep.subr.mxu0 0.0
    %142 = vmatpush2.msra.mxu0 0.0
    %143 = vmatprep.subr.mxu0 0.0
    %144 = vmatpush2.msra.mxu0 0.0
    %145 = vmatprep.subr.mxu0 0.0
    %146 = vmatpush2.msra.mxu0 0.0
    %147 = vmatprep.subr.mxu0 0.0
    %148 = vmatpush2.msra.mxu0 0.0
    %149 = vmatprep.subr.mxu0 0.0
    %150 = vmatpush2.msra.mxu0 0.0
    %151 = vmatprep.subr.mxu0 0.0
    %152 = vmatpush2.msra.mxu0 0.0
    %153 = vmatprep.subr.mxu0 0.0
    %154 = vmatpush2.msra.mxu0 0.0
    %155 = vmatprep.subr.mxu0 0.0
    %156 = vmatpush2.msra.mxu0 0.0
    %157 = vmatprep.subr.mxu0 0.0
    %158 = vmatpush2.msra.mxu0 0.0
    %159 = vmatprep.mubr.f32.mxu0 0.0
    %160 = vmatmul.mubr.f32.gmra.mxu0 %v90
    %v161 = vpop.f32.mrf.mxu0
    %v162 = vadd.f32 %v87, %v161
    %v163 = vpop.f32.mrf.mxu0
    %164 = vmatprep.mubr.f32.mxu0 0.0
    %165 = vmatmul.mubr.f32.gmra.mxu0 %v93
    %v166 = vpop.f32.mrf.mxu0
    %v167 = vadd.f32 %v87, %v166
    %v168 = vpop.f32.mrf.mxu0
    %169 = vdwg.mxu0
    %v170 = vlaneseq
    %v171 = vshrl.u32 %v170, 7
    %v172 = vsub.s32 0, %v171
    %v173 = vrot.slane %v47, %v172
    %v175 = vsel %vm88, %v31, 0
    %v178 = vsel %vm88, %v32, 0
    %v181 = vsel %vm88, %v33, 0
    %183 = vmatprep.subr.mxu0 0.0
    %184 = vmatpush1.msra.mxu0 0.0
    %185 = vmatprep.subr.mxu0 0.0
    %186 = vmatpush1.msra.mxu0 0.0
    %187 = vmatprep.subr.mxu0 0.0
    %188 = vmatpush1.msra.mxu0 0.0
    %189 = vmatprep.subr.mxu0 0.0
    %190 = vmatpush1.msra.mxu0 0.0
    %191 = vmatprep.subr.mxu0 0.0
    %192 = vmatpush1.msra.mxu0 0.0
    %193 = vmatprep.subr.mxu0 0.0
    %194 = vmatpush1.msra.mxu0 0.0
    %195 = vmatprep.subr.mxu0 0.0
    %196 = vmatpush1.msra.mxu0 0.0
    %197 = vmatprep.subr.mxu0 0.0
    %198 = vmatpush1.msra.mxu0 0.0
    %199 = vmatprep.subr.mxu0 0.0
    %200 = vmatpush1.msra.mxu0 0.0
    %201 = vmatprep.subr.mxu0 0.0
    %202 = vmatpush1.msra.mxu0 0.0
    %203 = vmatprep.subr.mxu0 0.0
    %204 = vmatpush1.msra.mxu0 0.0
    %205 = vmatprep.subr.mxu0 0.0
    %206 = vmatpush1.msra.mxu0 0.0
    %207 = vmatprep.subr.mxu0 0.0
    %208 = vmatpush1.msra.mxu0 0.0
    %209 = vmatprep.subr.mxu0 0.0
    %210 = vmatpush1.msra.mxu0 %v39
    %211 = vmatprep.subr.mxu0 0.0
    %212 = vmatpush1.msra.mxu0 %v38
    %213 = vmatprep.subr.mxu0 0.0
    %214 = vmatpush1.msra.mxu0 %v37
    %215 = vmatprep.subr.mxu0 0.0
    %216 = vmatpush2.msra.mxu0 0.0
    %217 = vmatprep.subr.mxu0 0.0
    %218 = vmatpush2.msra.mxu0 0.0
    %219 = vmatprep.subr.mxu0 0.0
    %220 = vmatpush2.msra.mxu0 0.0
    %221 = vmatprep.subr.mxu0 0.0
    %222 = vmatpush2.msra.mxu0 0.0
    %223 = vmatprep.subr.mxu0 0.0
    %224 = vmatpush2.msra.mxu0 0.0
    %225 = vmatprep.subr.mxu0 0.0
    %226 = vmatpush2.msra.mxu0 0.0
    %227 = vmatprep.subr.mxu0 0.0
    %228 = vmatpush2.msra.mxu0 0.0
    %229 = vmatprep.subr.mxu0 0.0
    %230 = vmatpush2.msra.mxu0 0.0
    %231 = vmatprep.subr.mxu0 0.0
    %232 = vmatpush2.msra.mxu0 0.0
    %233 = vmatprep.subr.mxu0 0.0
    %234 = vmatpush2.msra.mxu0 0.0
    %235 = vmatprep.subr.mxu0 0.0
    %236 = vmatpush2.msra.mxu0 0.0
    %237 = vmatprep.subr.mxu0 0.0
    %238 = vmatpush2.msra.mxu0 0.0
    %239 = vmatprep.subr.mxu0 0.0
    %240 = vmatpush2.msra.mxu0 0.0
    %241 = vmatprep.subr.mxu0 0.0
    %242 = vmatpush2.msra.mxu0 0.0
    %243 = vmatprep.subr.mxu0 0.0
    %244 = vmatpush2.msra.mxu0 0.0
    %245 = vmatprep.subr.mxu0 0.0
    %246 = vmatpush2.msra.mxu0 0.0
    %247 = vmatprep.mubr.f32.mxu0 0.0
    %248 = vmatmul.mubr.f32.gmra.mxu0 %v175
    %v249 = vpop.f32.mrf.mxu0
    %v250 = vadd.f32 %v173, %v249
    %v251 = vpop.f32.mrf.mxu0
    %252 = vmatprep.mubr.f32.mxu0 0.0
    %253 = vmatmul.mubr.f32.gmra.mxu0 %v178
    %v254 = vpop.f32.mrf.mxu0
    %v255 = vadd.f32 %v173, %v254
    %v256 = vpop.f32.mrf.mxu0
    %257 = vmatprep.mubr.f32.mxu0 0.0
    %258 = vmatmul.mubr.f32.gmra.mxu0 %v181
    %v259 = vpop.f32.mrf.mxu0
    %v260 = vadd.f32 %v173, %v259
    %v261 = vpop.f32.mrf.mxu0
    %262 = vdwg.mxu0
    %v263 = vlaneseq
    %v264 = vshrl.u32 %v263, 7
    %v265 = vsub.s32 0, %v264
    %v266 = vrot.slane %v48, %v265
    %267 = vmatprep.subr.mxu0 0.0
    %268 = vmatpush1.msra.mxu0 0.0
    %269 = vmatprep.subr.mxu0 0.0
    %270 = vmatpush1.msra.mxu0 0.0
    %271 = vmatprep.subr.mxu0 0.0
    %272 = vmatpush1.msra.mxu0 0.0
    %273 = vmatprep.subr.mxu0 0.0
    %274 = vmatpush1.msra.mxu0 0.0
    %275 = vmatprep.subr.mxu0 0.0
    %276 = vmatpush1.msra.mxu0 0.0
    %277 = vmatprep.subr.mxu0 0.0
    %278 = vmatpush1.msra.mxu0 0.0
    %279 = vmatprep.subr.mxu0 0.0
    %280 = vmatpush1.msra.mxu0 0.0
    %281 = vmatprep.subr.mxu0 0.0
    %282 = vmatpush1.msra.mxu0 0.0
    %283 = vmatprep.subr.mxu0 0.0
    %284 = vmatpush1.msra.mxu0 0.0
    %285 = vmatprep.subr.mxu0 0.0
    %286 = vmatpush1.msra.mxu0 0.0
    %287 = vmatprep.subr.mxu0 0.0
    %288 = vmatpush1.msra.mxu0 0.0
    %289 = vmatprep.subr.mxu0 0.0
    %290 = vmatpush1.msra.mxu0 0.0
    %291 = vmatprep.subr.mxu0 0.0
    %292 = vmatpush1.msra.mxu0 0.0
    %293 = vmatprep.subr.mxu0 0.0
    %294 = vmatpush1.msra.mxu0 %v42
    %295 = vmatprep.subr.mxu0 0.0
    %296 = vmatpush1.msra.mxu0 %v41
    %297 = vmatprep.subr.mxu0 0.0
    %298 = vmatpush1.msra.mxu0 %v40
    %299 = vmatprep.subr.mxu0 0.0
    %300 = vmatpush2.msra.mxu0 0.0
    %301 = vmatprep.subr.mxu0 0.0
    %302 = vmatpush2.msra.mxu0 0.0
    %303 = vmatprep.subr.mxu0 0.0
    %304 = vmatpush2.msra.mxu0 0.0
    %305 = vmatprep.subr.mxu0 0.0
    %306 = vmatpush2.msra.mxu0 0.0
    %307 = vmatprep.subr.mxu0 0.0
    %308 = vmatpush2.msra.mxu0 0.0
    %309 = vmatprep.subr.mxu0 0.0
    %310 = vmatpush2.msra.mxu0 0.0
    %311 = vmatprep.subr.mxu0 0.0
    %312 = vmatpush2.msra.mxu0 0.0
    %313 = vmatprep.subr.mxu0 0.0
    %314 = vmatpush2.msra.mxu0 0.0
    %315 = vmatprep.subr.mxu0 0.0
    %316 = vmatpush2.msra.mxu0 0.0
    %317 = vmatprep.subr.mxu0 0.0
    %318 = vmatpush2.msra.mxu0 0.0
    %319 = vmatprep.subr.mxu0 0.0
    %320 = vmatpush2.msra.mxu0 0.0
    %321 = vmatprep.subr.mxu0 0.0
    %322 = vmatpush2.msra.mxu0 0.0
    %323 = vmatprep.subr.mxu0 0.0
    %324 = vmatpush2.msra.mxu0 0.0
    %325 = vmatprep.subr.mxu0 0.0
    %326 = vmatpush2.msra.mxu0 0.0
    %327 = vmatprep.subr.mxu0 0.0
    %328 = vmatpush2.msra.mxu0 0.0
    %329 = vmatprep.subr.mxu0 0.0
    %330 = vmatpush2.msra.mxu0 0.0
    %331 = vmatprep.mubr.f32.mxu0 0.0
    %332 = vmatmul.mubr.f32.gmra.mxu0 %v175
    %v333 = vpop.f32.mrf.mxu0
    %v334 = vadd.f32 %v266, %v333
    %v335 = vpop.f32.mrf.mxu0
    %336 = vmatprep.mubr.f32.mxu0 0.0
    %337 = vmatmul.mubr.f32.gmra.mxu0 %v178
    %v338 = vpop.f32.mrf.mxu0
    %v339 = vadd.f32 %v266, %v338
    %v340 = vpop.f32.mrf.mxu0
    %341 = vmatprep.mubr.f32.mxu0 0.0
    %342 = vmatmul.mubr.f32.gmra.mxu0 %v181
    %v343 = vpop.f32.mrf.mxu0
    %v344 = vadd.f32 %v266, %v343
    %v345 = vpop.f32.mrf.mxu0
    %346 = vdwg.mxu0
    %vm347 = vcmask 162816
    %v349 = vsel %vm347, %v62, 0
    %v352 = vsel %vm347, %v63, 0
    %v355 = vsel %vm347, %v64, 0
    %v358 = vsel %vm347, %v65, 0
    %v361 = vsel %vm347, %v66, 0
    %v364 = vsel %vm347, %v67, 0
    %v367 = vsel %vm347, %v68, 0
    %v370 = vsel %vm347, %v69, 0
    %v373 = vsel %vm347, %v70, 0
    %v376 = vsel %vm347, %v71, 0
    %vm378 = vcmask 1043456
    %v380 = vsel %vm378, %v260, 0
    %382 = vmatprep.subr.mxu0 0.0
    %383 = vmatpush1.msra.mxu0 0.0
    %384 = vmatprep.subr.mxu0 0.0
    %385 = vmatpush1.msra.mxu0 0.0
    %386 = vmatprep.subr.mxu0 0.0
    %387 = vmatpush1.msra.mxu0 0.0
    %388 = vmatprep.subr.mxu0 0.0
    %389 = vmatpush1.msra.mxu0 0.0
    %390 = vmatprep.subr.mxu0 0.0
    %391 = vmatpush1.msra.mxu0 0.0
    %392 = vmatprep.subr.mxu0 0.0
    %393 = vmatpush1.msra.mxu0 0.0
    %394 = vmatprep.subr.mxu0 0.0
    %395 = vmatpush1.msra.mxu0 0.0
    %396 = vmatprep.subr.mxu0 0.0
    %397 = vmatpush1.msra.mxu0 0.0
    %398 = vmatprep.subr.mxu0 0.0
    %399 = vmatpush1.msra.mxu0 0.0
    %400 = vmatprep.subr.mxu0 0.0
    %401 = vmatpush1.msra.mxu0 0.0
    %402 = vmatprep.subr.mxu0 0.0
    %403 = vmatpush1.msra.mxu0 0.0
    %404 = vmatprep.subr.mxu0 0.0
    %405 = vmatpush1.msra.mxu0 0.0
    %406 = vmatprep.subr.mxu0 0.0
    %407 = vmatpush1.msra.mxu0 0.0
    %408 = vmatprep.subr.mxu0 0.0
    %409 = vmatpush1.msra.mxu0 %v380
    %410 = vmatprep.subr.mxu0 0.0
    %411 = vmatpush1.msra.mxu0 %v255
    %412 = vmatprep.subr.mxu0 0.0
    %413 = vmatpush1.msra.mxu0 %v250
    %414 = vmatprep.subr.mxu0 0.0
    %415 = vmatpush2.msra.mxu0 0.0
    %416 = vmatprep.subr.mxu0 0.0
    %417 = vmatpush2.msra.mxu0 0.0
    %418 = vmatprep.subr.mxu0 0.0
    %419 = vmatpush2.msra.mxu0 0.0
    %420 = vmatprep.subr.mxu0 0.0
    %421 = vmatpush2.msra.mxu0 0.0
    %422 = vmatprep.subr.mxu0 0.0
    %423 = vmatpush2.msra.mxu0 0.0
    %424 = vmatprep.subr.mxu0 0.0
    %425 = vmatpush2.msra.mxu0 0.0
    %426 = vmatprep.subr.mxu0 0.0
    %427 = vmatpush2.msra.mxu0 0.0
    %428 = vmatprep.subr.mxu0 0.0
    %429 = vmatpush2.msra.mxu0 0.0
    %430 = vmatprep.subr.mxu0 0.0
    %431 = vmatpush2.msra.mxu0 0.0
    %432 = vmatprep.subr.mxu0 0.0
    %433 = vmatpush2.msra.mxu0 0.0
    %434 = vmatprep.subr.mxu0 0.0
    %435 = vmatpush2.msra.mxu0 0.0
    %436 = vmatprep.subr.mxu0 0.0
    %437 = vmatpush2.msra.mxu0 0.0
    %438 = vmatprep.subr.mxu0 0.0
    %439 = vmatpush2.msra.mxu0 0.0
    %440 = vmatprep.subr.mxu0 0.0
    %441 = vmatpush2.msra.mxu0 0.0
    %442 = vmatprep.subr.mxu0 0.0
    %443 = vmatpush2.msra.mxu0 0.0
    %444 = vmatprep.subr.mxu0 0.0
    %445 = vmatpush2.msra.mxu0 0.0
    %446 = vmatprep.mubr.f32.mxu0 0.0
    %447 = vmatmul.mubr.f32.gmra.mxu0 %v349
    %v448 = vpop.f32.mrf.mxu0
    %v449 = vadd.f32 0.0, %v448
    %v450 = vpop.f32.mrf.mxu0
    %451 = vmatprep.mubr.f32.mxu0 0.0
    %452 = vmatmul.mubr.f32.gmra.mxu0 %v352
    %v453 = vpop.f32.mrf.mxu0
    %v454 = vadd.f32 0.0, %v453
    %v455 = vpop.f32.mrf.mxu0
    %456 = vmatprep.mubr.f32.mxu0 0.0
    %457 = vmatmul.mubr.f32.gmra.mxu0 %v355
    %v458 = vpop.f32.mrf.mxu0
    %v459 = vadd.f32 0.0, %v458
    %v460 = vpop.f32.mrf.mxu0
    %461 = vmatprep.mubr.f32.mxu0 0.0
    %462 = vmatmul.mubr.f32.gmra.mxu0 %v358
    %v463 = vpop.f32.mrf.mxu0
    %v464 = vadd.f32 0.0, %v463
    %v465 = vpop.f32.mrf.mxu0
    %466 = vmatprep.mubr.f32.mxu0 0.0
    %467 = vmatmul.mubr.f32.gmra.mxu0 %v361
    %v468 = vpop.f32.mrf.mxu0
    %v469 = vadd.f32 0.0, %v468
    %v470 = vpop.f32.mrf.mxu0
    %471 = vmatprep.mubr.f32.mxu0 0.0
    %472 = vmatmul.mubr.f32.gmra.mxu0 %v364
    %v473 = vpop.f32.mrf.mxu0
    %v474 = vadd.f32 0.0, %v473
    %v475 = vpop.f32.mrf.mxu0
    %476 = vmatprep.mubr.f32.mxu0 0.0
    %477 = vmatmul.mubr.f32.gmra.mxu0 %v367
    %v478 = vpop.f32.mrf.mxu0
    %v479 = vadd.f32 0.0, %v478
    %v480 = vpop.f32.mrf.mxu0
    %481 = vmatprep.mubr.f32.mxu0 0.0
    %482 = vmatmul.mubr.f32.gmra.mxu0 %v370
    %v483 = vpop.f32.mrf.mxu0
    %v484 = vadd.f32 0.0, %v483
    %v485 = vpop.f32.mrf.mxu0
    %486 = vmatprep.mubr.f32.mxu0 0.0
    %487 = vmatmul.mubr.f32.gmra.mxu0 %v373
    %v488 = vpop.f32.mrf.mxu0
    %v489 = vadd.f32 0.0, %v488
    %v490 = vpop.f32.mrf.mxu0
    %491 = vmatprep.mubr.f32.mxu0 0.0
    %492 = vmatmul.mubr.f32.gmra.mxu0 %v376
    %v493 = vpop.f32.mrf.mxu0
    %v494 = vadd.f32 0.0, %v493
    %v495 = vpop.f32.mrf.mxu0
    %496 = vdwg.mxu0
    %v497 = vmul.f32 %v449, %v52
    %v498 = vmul.f32 %v454, %v53
    %v499 = vmul.f32 %v459, %v54
    %v500 = vmul.f32 %v464, %v55
    %v501 = vmul.f32 %v469, %v56
    %v502 = vmul.f32 %v474, %v57
    %v503 = vmul.f32 %v479, %v58
    %v504 = vmul.f32 %v484, %v59
    %v505 = vmul.f32 %v489, %v60
    %v506 = vmul.f32 %v494, %v61
    %v508 = vsel %vm378, %v344, 0
    %510 = vmatprep.subr.mxu0 0.0
    %511 = vmatpush1.msra.mxu0 0.0
    %512 = vmatprep.subr.mxu0 0.0
    %513 = vmatpush1.msra.mxu0 0.0
    %514 = vmatprep.subr.mxu0 0.0
    %515 = vmatpush1.msra.mxu0 0.0
    %516 = vmatprep.subr.mxu0 0.0
    %517 = vmatpush1.msra.mxu0 0.0
    %518 = vmatprep.subr.mxu0 0.0
    %519 = vmatpush1.msra.mxu0 0.0
    %520 = vmatprep.subr.mxu0 0.0
    %521 = vmatpush1.msra.mxu0 0.0
    %522 = vmatprep.subr.mxu0 0.0
    %523 = vmatpush1.msra.mxu0 0.0
    %524 = vmatprep.subr.mxu0 0.0
    %525 = vmatpush1.msra.mxu0 0.0
    %526 = vmatprep.subr.mxu0 0.0
    %527 = vmatpush1.msra.mxu0 0.0
    %528 = vmatprep.subr.mxu0 0.0
    %529 = vmatpush1.msra.mxu0 0.0
    %530 = vmatprep.subr.mxu0 0.0
    %531 = vmatpush1.msra.mxu0 0.0
    %532 = vmatprep.subr.mxu0 0.0
    %533 = vmatpush1.msra.mxu0 0.0
    %534 = vmatprep.subr.mxu0 0.0
    %535 = vmatpush1.msra.mxu0 0.0
    %536 = vmatprep.subr.mxu0 0.0
    %537 = vmatpush1.msra.mxu0 %v508
    %538 = vmatprep.subr.mxu0 0.0
    %539 = vmatpush1.msra.mxu0 %v339
    %540 = vmatprep.subr.mxu0 0.0
    %541 = vmatpush1.msra.mxu0 %v334
    %542 = vmatprep.subr.mxu0 0.0
    %543 = vmatpush2.msra.mxu0 0.0
    %544 = vmatprep.subr.mxu0 0.0
    %545 = vmatpush2.msra.mxu0 0.0
    %546 = vmatprep.subr.mxu0 0.0
    %547 = vmatpush2.msra.mxu0 0.0
    %548 = vmatprep.subr.mxu0 0.0
    %549 = vmatpush2.msra.mxu0 0.0
    %550 = vmatprep.subr.mxu0 0.0
    %551 = vmatpush2.msra.mxu0 0.0
    %552 = vmatprep.subr.mxu0 0.0
    %553 = vmatpush2.msra.mxu0 0.0
    %554 = vmatprep.subr.mxu0 0.0
    %555 = vmatpush2.msra.mxu0 0.0
    %556 = vmatprep.subr.mxu0 0.0
    %557 = vmatpush2.msra.mxu0 0.0
    %558 = vmatprep.subr.mxu0 0.0
    %559 = vmatpush2.msra.mxu0 0.0
    %560 = vmatprep.subr.mxu0 0.0
    %561 = vmatpush2.msra.mxu0 0.0
    %562 = vmatprep.subr.mxu0 0.0
    %563 = vmatpush2.msra.mxu0 0.0
    %564 = vmatprep.subr.mxu0 0.0
    %565 = vmatpush2.msra.mxu0 0.0
    %566 = vmatprep.subr.mxu0 0.0
    %567 = vmatpush2.msra.mxu0 0.0
    %568 = vmatprep.subr.mxu0 0.0
    %569 = vmatpush2.msra.mxu0 0.0
    %570 = vmatprep.subr.mxu0 0.0
    %571 = vmatpush2.msra.mxu0 0.0
    %572 = vmatprep.subr.mxu0 0.0
    %573 = vmatpush2.msra.mxu0 0.0
    %574 = vmatprep.mubr.f32.mxu0 0.0
    %575 = vmatmul.mubr.f32.gmra.mxu0 %v349
    %v576 = vpop.f32.mrf.mxu0
    %v577 = vadd.f32 0.0, %v576
    %v578 = vpop.f32.mrf.mxu0
    %579 = vmatprep.mubr.f32.mxu0 0.0
    %580 = vmatmul.mubr.f32.gmra.mxu0 %v352
    %v581 = vpop.f32.mrf.mxu0
    %v582 = vadd.f32 0.0, %v581
    %v583 = vpop.f32.mrf.mxu0
    %584 = vmatprep.mubr.f32.mxu0 0.0
    %585 = vmatmul.mubr.f32.gmra.mxu0 %v355
    %v586 = vpop.f32.mrf.mxu0
    %v587 = vadd.f32 0.0, %v586
    %v588 = vpop.f32.mrf.mxu0
    %589 = vmatprep.mubr.f32.mxu0 0.0
    %590 = vmatmul.mubr.f32.gmra.mxu0 %v358
    %v591 = vpop.f32.mrf.mxu0
    %v592 = vadd.f32 0.0, %v591
    %v593 = vpop.f32.mrf.mxu0
    %594 = vmatprep.mubr.f32.mxu0 0.0
    %595 = vmatmul.mubr.f32.gmra.mxu0 %v361
    %v596 = vpop.f32.mrf.mxu0
    %v597 = vadd.f32 0.0, %v596
    %v598 = vpop.f32.mrf.mxu0
    %599 = vmatprep.mubr.f32.mxu0 0.0
    %600 = vmatmul.mubr.f32.gmra.mxu0 %v364
    %v601 = vpop.f32.mrf.mxu0
    %v602 = vadd.f32 0.0, %v601
    %v603 = vpop.f32.mrf.mxu0
    %604 = vmatprep.mubr.f32.mxu0 0.0
    %605 = vmatmul.mubr.f32.gmra.mxu0 %v367
    %v606 = vpop.f32.mrf.mxu0
    %v607 = vadd.f32 0.0, %v606
    %v608 = vpop.f32.mrf.mxu0
    %609 = vmatprep.mubr.f32.mxu0 0.0
    %610 = vmatmul.mubr.f32.gmra.mxu0 %v370
    %v611 = vpop.f32.mrf.mxu0
    %v612 = vadd.f32 0.0, %v611
    %v613 = vpop.f32.mrf.mxu0
    %614 = vmatprep.mubr.f32.mxu0 0.0
    %615 = vmatmul.mubr.f32.gmra.mxu0 %v373
    %v616 = vpop.f32.mrf.mxu0
    %v617 = vadd.f32 0.0, %v616
    %v618 = vpop.f32.mrf.mxu0
    %619 = vmatprep.mubr.f32.mxu0 0.0
    %620 = vmatmul.mubr.f32.gmra.mxu0 %v376
    %v621 = vpop.f32.mrf.mxu0
    %v622 = vadd.f32 0.0, %v621
    %v623 = vpop.f32.mrf.mxu0
    %624 = vdwg.mxu0
    %v625 = vmul.f32 %v577, %v52
    %v626 = vmul.f32 %v582, %v53
    %v627 = vmul.f32 %v587, %v54
    %v628 = vmul.f32 %v592, %v55
    %v629 = vmul.f32 %v597, %v56
    %v630 = vmul.f32 %v602, %v57
    %v631 = vmul.f32 %v607, %v58
    %v632 = vmul.f32 %v612, %v59
    %v633 = vmul.f32 %v617, %v60
    %v634 = vmul.f32 %v622, %v61
    %v636 = vsel %vm88, %v162, 0
    %v639 = vsel %vm88, %v167, 0
    %v642 = vsel %vm88, %v497, 0
    %v645 = vsel %vm88, %v498, 0
    %v648 = vsel %vm88, %v499, 0
    %v651 = vsel %vm88, %v500, 0
    %v654 = vsel %vm88, %v501, 0
    %v657 = vsel %vm88, %v502, 0
    %v660 = vsel %vm88, %v503, 0
    %v663 = vsel %vm88, %v504, 0
    %v666 = vsel %vm88, %v505, 0
    %v669 = vsel %vm88, %v506, 0
    %671 = vmatprep.subr.mxu0 0.0
    %672 = vmatpush1.xpose.msra.mxu0 0.0
    %673 = vmatprep.subr.mxu0 0.0
    %674 = vmatpush1.xpose.msra.mxu0 0.0
    %675 = vmatprep.subr.mxu0 0.0
    %676 = vmatpush1.xpose.msra.mxu0 0.0
    %677 = vmatprep.subr.mxu0 0.0
    %678 = vmatpush1.xpose.msra.mxu0 0.0
    %679 = vmatprep.subr.mxu0 0.0
    %680 = vmatpush1.xpose.msra.mxu0 0.0
    %681 = vmatprep.subr.mxu0 0.0
    %682 = vmatpush1.xpose.msra.mxu0 0.0
    %683 = vmatprep.subr.mxu0 0.0
    %684 = vmatpush1.xpose.msra.mxu0 %v669
    %685 = vmatprep.subr.mxu0 0.0
    %686 = vmatpush1.xpose.msra.mxu0 %v666
    %687 = vmatprep.subr.mxu0 0.0
    %688 = vmatpush1.xpose.msra.mxu0 %v663
    %689 = vmatprep.subr.mxu0 0.0
    %690 = vmatpush1.xpose.msra.mxu0 %v660
    %691 = vmatprep.subr.mxu0 0.0
    %692 = vmatpush1.xpose.msra.mxu0 %v657
    %693 = vmatprep.subr.mxu0 0.0
    %694 = vmatpush1.xpose.msra.mxu0 %v654
    %695 = vmatprep.subr.mxu0 0.0
    %696 = vmatpush1.xpose.msra.mxu0 %v651
    %697 = vmatprep.subr.mxu0 0.0
    %698 = vmatpush1.xpose.msra.mxu0 %v648
    %699 = vmatprep.subr.mxu0 0.0
    %700 = vmatpush1.xpose.msra.mxu0 %v645
    %701 = vmatprep.subr.mxu0 0.0
    %702 = vmatpush1.xpose.msra.mxu0 %v642
    %703 = vmatprep.subr.mxu0 0.0
    %704 = vmatpush2.xpose.msra.mxu0 0.0
    %705 = vmatprep.subr.mxu0 0.0
    %706 = vmatpush2.xpose.msra.mxu0 0.0
    %707 = vmatprep.subr.mxu0 0.0
    %708 = vmatpush2.xpose.msra.mxu0 0.0
    %709 = vmatprep.subr.mxu0 0.0
    %710 = vmatpush2.xpose.msra.mxu0 0.0
    %711 = vmatprep.subr.mxu0 0.0
    %712 = vmatpush2.xpose.msra.mxu0 0.0
    %713 = vmatprep.subr.mxu0 0.0
    %714 = vmatpush2.xpose.msra.mxu0 0.0
    %715 = vmatprep.subr.mxu0 0.0
    %716 = vmatpush2.xpose.msra.mxu0 0.0
    %717 = vmatprep.subr.mxu0 0.0
    %718 = vmatpush2.xpose.msra.mxu0 0.0
    %719 = vmatprep.subr.mxu0 0.0
    %720 = vmatpush2.xpose.msra.mxu0 0.0
    %721 = vmatprep.subr.mxu0 0.0
    %722 = vmatpush2.xpose.msra.mxu0 0.0
    %723 = vmatprep.subr.mxu0 0.0
    %724 = vmatpush2.xpose.msra.mxu0 0.0
    %725 = vmatprep.subr.mxu0 0.0
    %726 = vmatpush2.xpose.msra.mxu0 0.0
    %727 = vmatprep.subr.mxu0 0.0
    %728 = vmatpush2.xpose.msra.mxu0 0.0
    %729 = vmatprep.subr.mxu0 0.0
    %730 = vmatpush2.xpose.msra.mxu0 0.0
    %731 = vmatprep.subr.mxu0 0.0
    %732 = vmatpush2.xpose.msra.mxu0 0.0
    %733 = vmatprep.subr.mxu0 0.0
    %734 = vmatpush2.xpose.msra.mxu0 0.0
    %735 = vmatprep.mubr.f32.mxu0 0.0
    %736 = vmatmul.mubr.f32.gmra.mxu0 %v636
    %v737 = vpop.f32.mrf.mxu0
    %v738 = vadd.f32 %v82, %v737
    %v739 = vpop.f32.mrf.mxu0
    %740 = vmatprep.mubr.f32.mxu0 0.0
    %741 = vmatmul.mubr.f32.gmra.mxu0 %v639
    %v742 = vpop.f32.mrf.mxu0
    %v743 = vadd.f32 %v83, %v742
    %v744 = vpop.f32.mrf.mxu0
    %745 = vdwg.mxu0
    %vm746 = vcmask 654336
    %v747 = vsel %vm746, %v738, -inf
    %748 = vmax.xlane.f32.xlu0 %v747
    %v749 = vpop.xlane.xlu0 %748
    %v750 = vsel %vm746, %v743, -inf
    %751 = vmax.xlane.f32.xlu0 %v750
    %v752 = vpop.xlane.xlu0 %751
    %v753 = vsub.f32 %v738, %v749
    %v754 = vsub.f32 %v743, %v752
    %v755 = vmul.f32 %v753, 1.442695
    %v756 = vpow.pop %v755
    %v757 = vmul.f32 %v754, 1.442695
    %v758 = vpow.pop %v757
    %v760 = vsel %vm746, %v756, 0
    %v763 = vsel %vm746, %v758, 0
    %765 = vmatprep.subr.mxu0 0.0
    %766 = vmatpush1.msra.mxu0 0.0
    %767 = vmatprep.subr.mxu0 0.0
    %768 = vmatpush1.msra.mxu0 0.0
    %769 = vmatprep.subr.mxu0 0.0
    %770 = vmatpush1.msra.mxu0 0.0
    %771 = vmatprep.subr.mxu0 0.0
    %772 = vmatpush1.msra.mxu0 0.0
    %773 = vmatprep.subr.mxu0 0.0
    %774 = vmatpush1.msra.mxu0 0.0
    %775 = vmatprep.subr.mxu0 0.0
    %776 = vmatpush1.msra.mxu0 0.0
    %777 = vmatprep.subr.mxu0 0.0
    %778 = vmatpush1.msra.mxu0 %v81
    %779 = vmatprep.subr.mxu0 0.0
    %780 = vmatpush1.msra.mxu0 %v80
    %781 = vmatprep.subr.mxu0 0.0
    %782 = vmatpush1.msra.mxu0 %v79
    %783 = vmatprep.subr.mxu0 0.0
    %784 = vmatpush1.msra.mxu0 %v78
    %785 = vmatprep.subr.mxu0 0.0
    %786 = vmatpush1.msra.mxu0 %v77
    %787 = vmatprep.subr.mxu0 0.0
    %788 = vmatpush1.msra.mxu0 %v76
    %789 = vmatprep.subr.mxu0 0.0
    %790 = vmatpush1.msra.mxu0 %v75
    %791 = vmatprep.subr.mxu0 0.0
    %792 = vmatpush1.msra.mxu0 %v74
    %793 = vmatprep.subr.mxu0 0.0
    %794 = vmatpush1.msra.mxu0 %v73
    %795 = vmatprep.subr.mxu0 0.0
    %796 = vmatpush1.msra.mxu0 %v72
    %797 = vmatprep.subr.mxu0 0.0
    %798 = vmatpush2.msra.mxu0 0.0
    %799 = vmatprep.subr.mxu0 0.0
    %800 = vmatpush2.msra.mxu0 0.0
    %801 = vmatprep.subr.mxu0 0.0
    %802 = vmatpush2.msra.mxu0 0.0
    %803 = vmatprep.subr.mxu0 0.0
    %804 = vmatpush2.msra.mxu0 0.0
    %805 = vmatprep.subr.mxu0 0.0
    %806 = vmatpush2.msra.mxu0 0.0
    %807 = vmatprep.subr.mxu0 0.0
    %808 = vmatpush2.msra.mxu0 0.0
    %809 = vmatprep.subr.mxu0 0.0
    %810 = vmatpush2.msra.mxu0 0.0
    %811 = vmatprep.subr.mxu0 0.0
    %812 = vmatpush2.msra.mxu0 0.0
    %813 = vmatprep.subr.mxu0 0.0
    %814 = vmatpush2.msra.mxu0 0.0
    %815 = vmatprep.subr.mxu0 0.0
    %816 = vmatpush2.msra.mxu0 0.0
    %817 = vmatprep.subr.mxu0 0.0
    %818 = vmatpush2.msra.mxu0 0.0
    %819 = vmatprep.subr.mxu0 0.0
    %820 = vmatpush2.msra.mxu0 0.0
    %821 = vmatprep.subr.mxu0 0.0
    %822 = vmatpush2.msra.mxu0 0.0
    %823 = vmatprep.subr.mxu0 0.0
    %824 = vmatpush2.msra.mxu0 0.0
    %825 = vmatprep.subr.mxu0 0.0
    %826 = vmatpush2.msra.mxu0 0.0
    %827 = vmatprep.subr.mxu0 0.0
    %828 = vmatpush2.msra.mxu0 0.0
    %829 = vmatprep.mubr.f32.mxu0 0.0
    %830 = vmatmul.mubr.f32.gmra.mxu0 %v760
    %v831 = vpop.f32.mrf.mxu0
    %v832 = vadd.f32 0.0, %v831
    %v833 = vpop.f32.mrf.mxu0
    %834 = vmatprep.mubr.f32.mxu0 0.0
    %835 = vmatmul.mubr.f32.gmra.mxu0 %v763
    %v836 = vpop.f32.mrf.mxu0
    %v837 = vadd.f32 0.0, %v836
    %v838 = vpop.f32.mrf.mxu0
    %839 = vdwg.mxu0
    %v840 = vmax.f32 %v832, 1e-30
    %v841 = vmax.f32 %v837, 1e-30
    %v842 = vrcp.pop %v840
    %v843 = vrcp.pop %v841
    %v844 = vmul.f32 %v756, %v842
    %v845 = vmul.f32 %v758, %v843
    %v847 = vsel %vm746, %v844, 0
    %v850 = vsel %vm746, %v845, 0
    %852 = vmatprep.subr.mxu0 0.0
    %853 = vmatpush1.msra.mxu0 0.0
    %854 = vmatprep.subr.mxu0 0.0
    %855 = vmatpush1.msra.mxu0 0.0
    %856 = vmatprep.subr.mxu0 0.0
    %857 = vmatpush1.msra.mxu0 0.0
    %858 = vmatprep.subr.mxu0 0.0
    %859 = vmatpush1.msra.mxu0 0.0
    %860 = vmatprep.subr.mxu0 0.0
    %861 = vmatpush1.msra.mxu0 0.0
    %862 = vmatprep.subr.mxu0 0.0
    %863 = vmatpush1.msra.mxu0 0.0
    %864 = vmatprep.subr.mxu0 0.0
    %865 = vmatpush1.msra.mxu0 %v634
    %866 = vmatprep.subr.mxu0 0.0
    %867 = vmatpush1.msra.mxu0 %v633
    %868 = vmatprep.subr.mxu0 0.0
    %869 = vmatpush1.msra.mxu0 %v632
    %870 = vmatprep.subr.mxu0 0.0
    %871 = vmatpush1.msra.mxu0 %v631
    %872 = vmatprep.subr.mxu0 0.0
    %873 = vmatpush1.msra.mxu0 %v630
    %874 = vmatprep.subr.mxu0 0.0
    %875 = vmatpush1.msra.mxu0 %v629
    %876 = vmatprep.subr.mxu0 0.0
    %877 = vmatpush1.msra.mxu0 %v628
    %878 = vmatprep.subr.mxu0 0.0
    %879 = vmatpush1.msra.mxu0 %v627
    %880 = vmatprep.subr.mxu0 0.0
    %881 = vmatpush1.msra.mxu0 %v626
    %882 = vmatprep.subr.mxu0 0.0
    %883 = vmatpush1.msra.mxu0 %v625
    %884 = vmatprep.subr.mxu0 0.0
    %885 = vmatpush2.msra.mxu0 0.0
    %886 = vmatprep.subr.mxu0 0.0
    %887 = vmatpush2.msra.mxu0 0.0
    %888 = vmatprep.subr.mxu0 0.0
    %889 = vmatpush2.msra.mxu0 0.0
    %890 = vmatprep.subr.mxu0 0.0
    %891 = vmatpush2.msra.mxu0 0.0
    %892 = vmatprep.subr.mxu0 0.0
    %893 = vmatpush2.msra.mxu0 0.0
    %894 = vmatprep.subr.mxu0 0.0
    %895 = vmatpush2.msra.mxu0 0.0
    %896 = vmatprep.subr.mxu0 0.0
    %897 = vmatpush2.msra.mxu0 0.0
    %898 = vmatprep.subr.mxu0 0.0
    %899 = vmatpush2.msra.mxu0 0.0
    %900 = vmatprep.subr.mxu0 0.0
    %901 = vmatpush2.msra.mxu0 0.0
    %902 = vmatprep.subr.mxu0 0.0
    %903 = vmatpush2.msra.mxu0 0.0
    %904 = vmatprep.subr.mxu0 0.0
    %905 = vmatpush2.msra.mxu0 0.0
    %906 = vmatprep.subr.mxu0 0.0
    %907 = vmatpush2.msra.mxu0 0.0
    %908 = vmatprep.subr.mxu0 0.0
    %909 = vmatpush2.msra.mxu0 0.0
    %910 = vmatprep.subr.mxu0 0.0
    %911 = vmatpush2.msra.mxu0 0.0
    %912 = vmatprep.subr.mxu0 0.0
    %913 = vmatpush2.msra.mxu0 0.0
    %914 = vmatprep.subr.mxu0 0.0
    %915 = vmatpush2.msra.mxu0 0.0
    %916 = vmatprep.mubr.f32.mxu0 0.0
    %917 = vmatmul.mubr.f32.gmra.mxu0 %v847
    %v918 = vpop.f32.mrf.mxu0
    %v919 = vadd.f32 0.0, %v918
    %v920 = vpop.f32.mrf.mxu0
    %921 = vmatprep.mubr.f32.mxu0 0.0
    %922 = vmatmul.mubr.f32.gmra.mxu0 %v850
    %v923 = vpop.f32.mrf.mxu0
    %v924 = vadd.f32 0.0, %v923
    %v925 = vpop.f32.mrf.mxu0
    %926 = vdwg.mxu0
    %v927 = vlaneseq
    %v928 = vshrl.u32 %v927, 7
    %v929 = vsub.s32 0, %v928
    %v930 = vrot.slane %v49, %v929
    %v932 = vsel %vm88, %v919, 0
    %v935 = vsel %vm88, %v924, 0
    %937 = vmatprep.subr.mxu0 0.0
    %938 = vmatpush1.msra.mxu0 0.0
    %939 = vmatprep.subr.mxu0 0.0
    %940 = vmatpush1.msra.mxu0 0.0
    %941 = vmatprep.subr.mxu0 0.0
    %942 = vmatpush1.msra.mxu0 0.0
    %943 = vmatprep.subr.mxu0 0.0
    %944 = vmatpush1.msra.mxu0 0.0
    %945 = vmatprep.subr.mxu0 0.0
    %946 = vmatpush1.msra.mxu0 0.0
    %947 = vmatprep.subr.mxu0 0.0
    %948 = vmatpush1.msra.mxu0 0.0
    %949 = vmatprep.subr.mxu0 0.0
    %950 = vmatpush1.msra.mxu0 0.0
    %951 = vmatprep.subr.mxu0 0.0
    %952 = vmatpush1.msra.mxu0 0.0
    %953 = vmatprep.subr.mxu0 0.0
    %954 = vmatpush1.msra.mxu0 0.0
    %955 = vmatprep.subr.mxu0 0.0
    %956 = vmatpush1.msra.mxu0 0.0
    %957 = vmatprep.subr.mxu0 0.0
    %958 = vmatpush1.msra.mxu0 0.0
    %959 = vmatprep.subr.mxu0 0.0
    %960 = vmatpush1.msra.mxu0 0.0
    %961 = vmatprep.subr.mxu0 0.0
    %962 = vmatpush1.msra.mxu0 0.0
    %963 = vmatprep.subr.mxu0 0.0
    %964 = vmatpush1.msra.mxu0 %v45
    %965 = vmatprep.subr.mxu0 0.0
    %966 = vmatpush1.msra.mxu0 %v44
    %967 = vmatprep.subr.mxu0 0.0
    %968 = vmatpush1.msra.mxu0 %v43
    %969 = vmatprep.subr.mxu0 0.0
    %970 = vmatpush2.msra.mxu0 0.0
    %971 = vmatprep.subr.mxu0 0.0
    %972 = vmatpush2.msra.mxu0 0.0
    %973 = vmatprep.subr.mxu0 0.0
    %974 = vmatpush2.msra.mxu0 0.0
    %975 = vmatprep.subr.mxu0 0.0
    %976 = vmatpush2.msra.mxu0 0.0
    %977 = vmatprep.subr.mxu0 0.0
    %978 = vmatpush2.msra.mxu0 0.0
    %979 = vmatprep.subr.mxu0 0.0
    %980 = vmatpush2.msra.mxu0 0.0
    %981 = vmatprep.subr.mxu0 0.0
    %982 = vmatpush2.msra.mxu0 0.0
    %983 = vmatprep.subr.mxu0 0.0
    %984 = vmatpush2.msra.mxu0 0.0
    %985 = vmatprep.subr.mxu0 0.0
    %986 = vmatpush2.msra.mxu0 0.0
    %987 = vmatprep.subr.mxu0 0.0
    %988 = vmatpush2.msra.mxu0 0.0
    %989 = vmatprep.subr.mxu0 0.0
    %990 = vmatpush2.msra.mxu0 0.0
    %991 = vmatprep.subr.mxu0 0.0
    %992 = vmatpush2.msra.mxu0 0.0
    %993 = vmatprep.subr.mxu0 0.0
    %994 = vmatpush2.msra.mxu0 0.0
    %995 = vmatprep.subr.mxu0 0.0
    %996 = vmatpush2.msra.mxu0 0.0
    %997 = vmatprep.subr.mxu0 0.0
    %998 = vmatpush2.msra.mxu0 0.0
    %999 = vmatprep.subr.mxu0 0.0
    %1000 = vmatpush2.msra.mxu0 0.0
    %1001 = vmatprep.mubr.f32.mxu0 0.0
    %1002 = vmatmul.mubr.f32.gmra.mxu0 %v932
    %v1003 = vpop.f32.mrf.mxu0
    %v1004 = vadd.f32 %v930, %v1003
    %v1005 = vpop.f32.mrf.mxu0
    %1006 = vmatprep.mubr.f32.mxu0 0.0
    %1007 = vmatmul.mubr.f32.gmra.mxu0 %v935
    %v1008 = vpop.f32.mrf.mxu0
    %v1009 = vadd.f32 %v930, %v1008
    %v1010 = vpop.f32.mrf.mxu0
    %1011 = vdwg.mxu0
    %v1012 = vadd.f32 %v1004, %v29
    %v1013 = vadd.f32 %v1009, %v30
    %v1014 = vsel %vm88, %v1012, 0.0
    %1015 = vadd.xlane.f32.xlu0 %v1014
    %v1016 = vpop.xlane.xlu0 %1015
    %v1017 = vsel %vm88, %v1013, 0.0
    %1018 = vadd.xlane.f32.xlu0 %v1017
    %v1019 = vpop.xlane.xlu0 %1018
    %v1020 = vrcp.pop 24.0
    %v1021 = vmul.f32 %v1016, %v1020
    %v1022 = vmul.f32 %v1019, %v1020
    %v1023 = vsub.f32 %v1012, %v1021
    %v1024 = vsub.f32 %v1013, %v1022
    %v1025 = vmul.f32 %v1023, %v1023
    %v1026 = vmul.f32 %v1024, %v1024
    %v1027 = vsel %vm88, %v1025, 0.0
    %1028 = vadd.xlane.f32.xlu0 %v1027
    %v1029 = vpop.xlane.xlu0 %1028
    %v1030 = vsel %vm88, %v1026, 0.0
    %1031 = vadd.xlane.f32.xlu0 %v1030
    %v1032 = vpop.xlane.xlu0 %1031
    %v1033 = vmul.f32 %v1029, %v1020
    %v1034 = vmul.f32 %v1032, %v1020
    %v1035 = vadd.f32 %v1033, 1e-05
    %v1036 = vadd.f32 %v1034, 1e-05
    %v1037 = vrsqrt.pop %v1035
    %v1038 = vrsqrt.pop %v1036
    %v1039 = vmul.f32 %v1023, %v1037
    %v1040 = vmul.f32 %v1024, %v1038
    %v1041 = vlaneseq
    %v1042 = vshrl.u32 %v1041, 7
    %v1043 = vsub.s32 0, %v1042
    %v1044 = vrot.slane %v50, %v1043
    %v1045 = vmul.f32 %v1039, %v1044
    %v1046 = vmul.f32 %v1040, %v1044
    %v1047 = vlaneseq
    %v1048 = vshrl.u32 %v1047, 7
    %v1049 = vsub.s32 0, %v1048
    %v1050 = vrot.slane %v51, %v1049
    %v1051 = vadd.f32 %v1045, %v1050
    %v1052 = vadd.f32 %v1046, %v1050
    %1053 = vst.msk [vmem:[#allocation5] sm:$0xff] %vm88, %v1051
    %1054 = vst.msk [vmem:[#allocation5 + $0x8] sm:$0xff] %vm88, %v1052
    // Predicated region
    $region18: #{run.1} parent=1 // pred_check
      _
    $region19: #{run.1} parent=1 // pred_check_branch
      %1056 = sbr.rel (0) target = $region21
    $region20: #{run.1} parent=1 // pred_region
      %s1058 = ssub.s32 256, 256
      %1059 = vsyncadd [#allocation4], %s1058
      %s1060 = sshll.u32 [#allocation5], 4
      %s1061 = int_to_ptr.vmem [resolvable:$true] %s1060
      %1066 = dma.vmem_to_hbm [thread:$0]  %s1061, 256, %s3, [#allocation4], 128, 128, 8
    $region21: #{run.1} parent=1 // pred_fallthru
      _
    // Predicated region
    $region22: #{run.1} parent=1 // pred_check
      _
    $region23: #{run.1} parent=1 // pred_check_branch
      %1068 = sbr.rel (0) target = $region25
    $region24: #{run.1} parent=1 // pred_region
      %1069 = dma.done [#allocation4], 256
    $region25: #{run.1} parent=1 // pred_fallthru
      _
    %1070 = vsyncpa [#allocation3], 1
    %1071 = vsyncpa [#allocation4], 1

</llo_original>
